<compile_context>
chip_gen: v5e
topology: v5e:2x2
jax: 0.10.0
libtpu: 0.0.40
codegen_flags: <defaults>
</compile_context>

<pallas_src>
import functools

import jax
import jax.numpy as jnp
from jax.experimental import pallas as pl
from jax.experimental.pallas import tpu as pltpu


def _round_up(x, m):
    return ((x + m - 1) // m) * m


def _focal_loss_kernel(logits_ref, targets_ref, alpha_ref, ce_ref, psum_ref,
                       *, gamma, n_total):
    # logits_ref: [C, T] (classes in sublanes, samples in lanes)
    # targets_ref: [1, T] int32, alpha_ref: [C, 1] f32
    # ce_ref: [1, T] per-sample cross entropy
    # psum_ref: [1, 128] per-tile partial sum of focal terms (lane 0)
    logits = logits_ref[...].astype(jnp.float32)              # [C, T]
    tgt = targets_ref[...]                                    # [1, T]
    alpha = alpha_ref[...].astype(jnp.float32)                # [C, 1]

    c, t = logits.shape
    cls = jax.lax.broadcasted_iota(jnp.int32, (c, t), 0)      # class id per row
    is_tgt = cls == tgt                                       # [C, T] bool

    # Numerically stable log-softmax pieces (sublane reductions, <=8 rows).
    col_max = jnp.max(logits, axis=0, keepdims=True)          # [1, T]
    exp_sh = jnp.exp(logits - col_max)                        # [C, T] (one EUP pass)
    sum_exp = jnp.sum(exp_sh, axis=0, keepdims=True)          # [1, T]

    tgt_logit = jnp.sum(jnp.where(is_tgt, logits, 0.0), axis=0, keepdims=True)
    tgt_exp = jnp.sum(jnp.where(is_tgt, exp_sh, 0.0), axis=0, keepdims=True)
    alpha_t = jnp.sum(jnp.where(is_tgt, alpha, 0.0), axis=0, keepdims=True)

    # cross_entropy(reduction='none') == logsumexp - logits[target]
    ce = jnp.log(sum_exp) + col_max - tgt_logit               # [1, T]

    # pt = exp(-ce), reusing the softmax exps.  Exact divide: the kernel is
    # HBM-bound, so the extra VPU/EUP work is free and keeps bit-level parity
    # with the reference much tighter than approx vrcp.
    pt = tgt_exp / sum_exp                                    # [1, T]
    one_m_pt = jnp.maximum(1.0 - pt, 0.0)                     # clamp: no NaN in pow

    if float(gamma) == int(gamma):
        w = jax.lax.integer_pow(one_m_pt, int(gamma))         # repeated multiplies
    else:
        w = one_m_pt ** gamma

    focal = alpha_t * w * ce                                  # [1, T]

    # Per-sample ce goes out as a lane-dense [1, T] block (OOB lanes of a
    # partial last block are dropped by the masked store; padded lanes in
    # [n, n_pad) are benign and sliced off in the wrapper).
    ce_ref[...] = ce

    # Mask padding / out-of-bounds lanes and emit only a per-tile partial sum
    # instead of a full per-sample focal stream (saves 2 HBM passes of 4N B).
    lane = jax.lax.broadcasted_iota(jnp.int32, (1, t), 1) + pl.program_id(0) * t
    focal = jnp.where(lane < n_total, focal, 0.0)
    tile_sum = jnp.sum(focal)                                 # scalar (XLU reduce)
    out_lane = jax.lax.broadcasted_iota(jnp.int32, (1, 128), 1)
    psum_ref[...] = jnp.where(out_lane == 0, tile_sum, 0.0)


@functools.partial(jax.jit, static_argnames=("gamma", "tile_n_max"))
def focal_loss(logits, targets, alpha, gamma=2, tile_n_max=65536):
    """Returns (scalar focal loss, per-sample ce_loss [N]).

    logits: [N, C], targets: [N] int, alpha: [C] class weights.
    The wrapper is jitted so the [N,C]->[C,N] transpose + 128-lane pad fuse
    into one copy; if the producer can emit logits already as [C, N], that
    copy disappears entirely.
    """
    n, c = logits.shape

    # Pad samples only to a lane multiple (<=127 junk lanes), independent of
    # the tile size; the grid uses a masked partial last block instead.
    n_pad = _round_up(max(n, 1), 128)
    # Cap the tile at ceil(n_pad/2) so there are always >=2 tiles when
    # possible: keeps both v7x TensorCores busy and the pipeline in steady
    # state.  Large cap amortizes the ~0.35us per-grid-step overhead.
    tile_n = min(int(tile_n_max), max(128, _round_up(pl.cdiv(n_pad, 2), 128)))
    grid_n = pl.cdiv(n_pad, tile_n)

    # [C, N] layout: classes -> sublanes, samples -> lanes (fused under jit).
    logits_t = jnp.transpose(logits)                          # [C, N], keep dtype
    targets_i32 = targets.astype(jnp.int32)
    if n_pad != n:
        logits_t = jnp.pad(logits_t, ((0, 0), (0, n_pad - n)))
        targets_i32 = jnp.pad(targets_i32, (0, n_pad - n))
    targets2d = targets_i32.reshape(1, n_pad)
    alpha2d = alpha.astype(jnp.float32).reshape(c, 1)

    kernel = functools.partial(_focal_loss_kernel, gamma=gamma, n_total=n)

    ce_full, psums = pl.pallas_call(
        kernel,
        out_shape=(
            jax.ShapeDtypeStruct((1, n_pad), jnp.float32),        # per-sample ce
            jax.ShapeDtypeStruct((1, grid_n * 128), jnp.float32),  # per-tile sums
        ),
        grid=(grid_n,),
        in_specs=[
            pl.BlockSpec((c, tile_n), lambda i: (0, i)),      # logits tile
            pl.BlockSpec((1, tile_n), lambda i: (0, i)),      # targets (lane-dense)
            pl.BlockSpec((c, 1), lambda i: (0, 0)),           # alpha (resident)
        ],
        out_specs=(
            pl.BlockSpec((1, tile_n), lambda i: (0, i)),      # ce
            pl.BlockSpec((1, 128), lambda i: (0, i)),         # partial focal sums
        ),
        compiler_params=pltpu.CompilerParams(
            # Independent tiles -> both v7x TensorCores can split the N axis.
            dimension_semantics=("parallel",),
            # ~5 MB double-buffered working set at tile_n=64K; 32 MiB is safe
            # on v5e/v6e (128 MiB) and v7x (64 MiB physical).
            vmem_limit_bytes=32 * 1024 * 1024),
    )(logits_t, targets2d, alpha2d)

    ce = ce_full[0, :n]
    loss = jnp.sum(psums) / n                                 # padded lanes masked
    return loss, ce


def _reference(logits, targets, alpha, gamma):
    log_probs = jax.nn.log_softmax(logits, axis=-1)
    ce_ref = -jnp.take_along_axis(log_probs, targets[:, None], axis=-1)[:, 0]
    pt_ref = jnp.exp(-ce_ref)
    loss_ref = jnp.mean(alpha[targets] * (1.0 - pt_ref) ** gamma * ce_ref)
    return loss_ref, ce_ref


if __name__ == "__main__":
    key = jax.random.PRNGKey(0)
    k1, k2, k3, k4, k5, k6 = jax.random.split(key, 6)

    # Synthetic "dataset" statistics (deterministic, in-script):
    # 7 emotion classes with these counts -> class_weights = total / count.
    # TODO(synk): the PyTorch __init__ computes these from a dataset via
    # np.bincount on the host; here they are provided as a constant array.
    class_counts = jnp.array([10, 20, 5, 15, 25, 8, 17], dtype=jnp.float32)
    total_samples = jnp.sum(class_counts)
    alpha = total_samples / class_counts            # == 1 / (count / total)
    C = 7

    # Case 1: small batch (single tile, padded to 128 lanes).
    N = 8
    logits = jax.random.normal(k1, (N, C), dtype=jnp.float32)
    targets = jax.random.randint(k2, (N,), 0, C, dtype=jnp.int32)

    loss, ce_loss = focal_loss(logits, targets, alpha, gamma=2)
    jax.block_until_ready((loss, ce_loss))

    loss_ref, ce_ref = _reference(logits, targets, alpha, 2)
    assert jnp.allclose(ce_loss, ce_ref, atol=1e-5, rtol=1e-5)
    assert jnp.allclose(loss, loss_ref, atol=1e-5, rtol=1e-5)

    # Case 2: N not a multiple of 128, multi-tile grid (exact tile division).
    N2 = 300
    logits2 = jax.random.normal(k3, (N2, C), dtype=jnp.float32)
    targets2 = jax.random.randint(k4, (N2,), 0, C, dtype=jnp.int32)

    loss2, ce_loss2 = focal_loss(logits2, targets2, alpha, gamma=2, tile_n_max=128)
    jax.block_until_ready((loss2, ce_loss2))

    loss2_ref, ce2_ref = _reference(logits2, targets2, alpha, 2)
    assert jnp.allclose(ce_loss2, ce2_ref, atol=1e-5, rtol=1e-5)
    assert jnp.allclose(loss2, loss2_ref, atol=1e-5, rtol=1e-5)

    # Case 3: partial last block (n_pad=640 not a multiple of tile_n=256),
    # exercising the masked OOB / padding path.
    N3 = 600
    logits3 = jax.random.normal(k5, (N3, C), dtype=jnp.float32)
    targets3 = jax.random.randint(k6, (N3,), 0, C, dtype=jnp.int32)

    loss3, ce_loss3 = focal_loss(logits3, targets3, alpha, gamma=2, tile_n_max=256)
    jax.block_until_ready((loss3, ce_loss3))

    loss3_ref, ce3_ref = _reference(logits3, targets3, alpha, 2)
    assert jnp.allclose(ce_loss3, ce3_ref, atol=1e-5, rtol=1e-5)
    assert jnp.allclose(loss3, loss3_ref, atol=1e-5, rtol=1e-5)

    print("KERNEL_OK")
</pallas_src>

<mosaic_0001>
module attributes {stable_mosaic.version = 11 : i64} {
  func.func @_focal_loss_kernel(%arg0: i32, %arg1: memref<7x128xf32, #tpu.memory_space<vmem>>, %arg2: memref<1x128xi32, #tpu.memory_space<vmem>>, %arg3: memref<7x1xf32, #tpu.memory_space<vmem>>, %arg4: memref<1x128xf32, #tpu.memory_space<vmem>>, %arg5: memref<1x128xf32, #tpu.memory_space<vmem>>) attributes {dimension_semantics = [#tpu.dimension_semantics<parallel>], iteration_bounds = array<i64: 1>, scalar_prefetch = 0 : i64, scratch_operands = 0 : i64, tpu.core_type = #tpu.core_type<tc>, window_params = [{transform_indices = @transform_0, window_bounds = array<i64: 7, 128>}, {transform_indices = @transform_1, window_bounds = array<i64: 1, 128>}, {pipeline_mode = #tpu.pipeline_mode<synchronous>, transform_indices = @transform_2, window_bounds = array<i64: 7, 1>}, {transform_indices = @transform_3, window_bounds = array<i64: 1, 128>}, {transform_indices = @transform_4, window_bounds = array<i64: 1, 128>}]} {
    %c0 = arith.constant 0 : index
    %c0_0 = arith.constant 0 : index
    %0 = vector.load %arg1[%c0, %c0_0] : memref<7x128xf32, #tpu.memory_space<vmem>>, vector<7x128xf32>
    %c0_1 = arith.constant 0 : index
    %c0_2 = arith.constant 0 : index
    %1 = vector.load %arg2[%c0_1, %c0_2] : memref<1x128xi32, #tpu.memory_space<vmem>>, vector<1x128xi32>
    %c0_3 = arith.constant 0 : index
    %c0_4 = arith.constant 0 : index
    %2 = vector.load %arg3[%c0_3, %c0_4] : memref<7x1xf32, #tpu.memory_space<vmem>>, vector<7x1xf32>
    %3 = tpu.iota {dimensions = array<i32: 0>} : vector<7x128xi32>
    %4 = vector.broadcast %1 : vector<1x128xi32> to vector<7x128xi32>
    %5 = arith.cmpi eq, %3, %4 : vector<7x128xi32>
    %cst = arith.constant dense<0xFF800000> : vector<128xf32>
    %6 = vector.multi_reduction <maximumf>, %0, %cst [0] : vector<7x128xf32> to vector<128xf32>
    %7 = vector.shape_cast %6 : vector<128xf32> to vector<1x128xf32>
    %8 = vector.broadcast %7 : vector<1x128xf32> to vector<7x128xf32>
    %9 = arith.subf %0, %8 : vector<7x128xf32>
    %10 = math.exp %9 : vector<7x128xf32>
    %cst_5 = arith.constant dense<0.000000e+00> : vector<128xf32>
    %11 = vector.multi_reduction <add>, %10, %cst_5 [0] : vector<7x128xf32> to vector<128xf32>
    %12 = vector.shape_cast %11 : vector<128xf32> to vector<1x128xf32>
    %cst_6 = arith.constant 0.000000e+00 : f32
    %13 = vector.broadcast %cst_6 : f32 to vector<7x128xf32>
    %14 = arith.select %5, %0, %13 : vector<7x128xi1>, vector<7x128xf32>
    %cst_7 = arith.constant dense<0.000000e+00> : vector<128xf32>
    %15 = vector.multi_reduction <add>, %14, %cst_7 [0] : vector<7x128xf32> to vector<128xf32>
    %16 = vector.shape_cast %15 : vector<128xf32> to vector<1x128xf32>
    %cst_8 = arith.constant 0.000000e+00 : f32
    %17 = vector.broadcast %cst_8 : f32 to vector<7x128xf32>
    %18 = arith.select %5, %10, %17 : vector<7x128xi1>, vector<7x128xf32>
    %cst_9 = arith.constant dense<0.000000e+00> : vector<128xf32>
    %19 = vector.multi_reduction <add>, %18, %cst_9 [0] : vector<7x128xf32> to vector<128xf32>
    %20 = vector.shape_cast %19 : vector<128xf32> to vector<1x128xf32>
    %cst_10 = arith.constant 0.000000e+00 : f32
    %21 = vector.shape_cast %2 : vector<7x1xf32> to vector<7x1xf32>
    %22 = vector.broadcast %21 : vector<7x1xf32> to vector<7x128xf32>
    %23 = vector.broadcast %cst_10 : f32 to vector<7x128xf32>
    %24 = arith.select %5, %22, %23 : vector<7x128xi1>, vector<7x128xf32>
    %cst_11 = arith.constant dense<0.000000e+00> : vector<128xf32>
    %25 = vector.multi_reduction <add>, %24, %cst_11 [0] : vector<7x128xf32> to vector<128xf32>
    %26 = vector.shape_cast %25 : vector<128xf32> to vector<1x128xf32>
    %27 = math.log %12 : vector<1x128xf32>
    %28 = arith.addf %27, %7 : vector<1x128xf32>
    %29 = arith.subf %28, %16 : vector<1x128xf32>
    %30 = arith.divf %20, %12 : vector<1x128xf32>
    %cst_12 = arith.constant 1.000000e+00 : f32
    %31 = vector.broadcast %cst_12 : f32 to vector<1x128xf32>
    %32 = arith.subf %31, %30 : vector<1x128xf32>
    %cst_13 = arith.constant 0.000000e+00 : f32
    %33 = vector.broadcast %cst_13 : f32 to vector<1x128xf32>
    %34 = arith.maximumf %32, %33 : vector<1x128xf32>
    %35 = arith.mulf %34, %34 : vector<1x128xf32>
    %36 = arith.mulf %26, %35 : vector<1x128xf32>
    %37 = arith.mulf %36, %29 : vector<1x128xf32>
    %c0_14 = arith.constant 0 : index
    %c0_15 = arith.constant 0 : index
    %38 = vector.load %arg4[%c0_14, %c0_15] : memref<1x128xf32, #tpu.memory_space<vmem>>, vector<1x128xf32>
    tpu.vector_store %arg4[%c0_14, %c0_15], %29 {strides = array<i32>} : memref<1x128xf32, #tpu.memory_space<vmem>>, vector<1x128xf32>,
    %39 = tpu.iota {dimensions = array<i32: 1>} : vector<1x128xi32>
    %c128_i32 = arith.constant 128 : i32
    %40 = arith.muli %arg0, %c128_i32 : i32
    %41 = vector.broadcast %40 : i32 to vector<1x128xi32>
    %42 = arith.addi %39, %41 : vector<1x128xi32>
    %c8_i32 = arith.constant 8 : i32
    %43 = vector.broadcast %c8_i32 : i32 to vector<1x128xi32>
    %44 = arith.cmpi slt, %42, %43 : vector<1x128xi32>
    %cst_16 = arith.constant 0.000000e+00 : f32
    %45 = vector.broadcast %cst_16 : f32 to vector<1x128xf32>
    %46 = arith.select %44, %37, %45 : vector<1x128xi1>, vector<1x128xf32>
    %47 = vector.shape_cast %46 : vector<1x128xf32> to vector<1x1x128xf32>
    %cst_17 = arith.constant dense<0.000000e+00> : vector<1xf32>
    %48 = vector.multi_reduction <add>, %47, %cst_17 [1, 2] : vector<1x1x128xf32> to vector<1xf32>
    %49 = vector.shape_cast %48 : vector<1xf32> to vector<1x1x1xf32>
    %50 = vector.extract %49[0, 0, 0] : f32 from vector<1x1x1xf32>
    %51 = tpu.iota {dimensions = array<i32: 1>} : vector<1x128xi32>
    %c0_i32 = arith.constant 0 : i32
    %52 = vector.broadcast %c0_i32 : i32 to vector<1x128xi32>
    %53 = arith.cmpi eq, %51, %52 : vector<1x128xi32>
    %cst_18 = arith.constant 0.000000e+00 : f32
    %54 = vector.broadcast %50 : f32 to vector<1x128xf32>
    %55 = vector.broadcast %cst_18 : f32 to vector<1x128xf32>
    %56 = arith.select %53, %54, %55 : vector<1x128xi1>, vector<1x128xf32>
    %c0_19 = arith.constant 0 : index
    %c0_20 = arith.constant 0 : index
    %57 = vector.load %arg5[%c0_19, %c0_20] : memref<1x128xf32, #tpu.memory_space<vmem>>, vector<1x128xf32>
    tpu.vector_store %arg5[%c0_19, %c0_20], %56 {strides = array<i32>} : memref<1x128xf32, #tpu.memory_space<vmem>>, vector<1x128xf32>,
    return
  }
  func.func @transform_0(%arg0: i32) -> (i32, i32) {
    %c0_i32 = arith.constant 0 : i32
    %c0_i32_0 = arith.constant 0 : i32
    return %c0_i32, %arg0 : i32, i32
  }
  func.func @transform_1(%arg0: i32) -> (i32, i32) {
    %c0_i32 = arith.constant 0 : i32
    %c0_i32_0 = arith.constant 0 : i32
    return %c0_i32, %arg0 : i32, i32
  }
  func.func @transform_2(%arg0: i32) -> (i32, i32) {
    %c0_i32 = arith.constant 0 : i32
    %c0_i32_0 = arith.constant 0 : i32
    %c0_i32_1 = arith.constant 0 : i32
    return %c0_i32, %c0_i32_0 : i32, i32
  }
  func.func @transform_3(%arg0: i32) -> (i32, i32) {
    %c0_i32 = arith.constant 0 : i32
    %c0_i32_0 = arith.constant 0 : i32
    return %c0_i32, %arg0 : i32, i32
  }
  func.func @transform_4(%arg0: i32) -> (i32, i32) {
    %c0_i32 = arith.constant 0 : i32
    %c0_i32_0 = arith.constant 0 : i32
    return %c0_i32, %arg0 : i32, i32
  }
}

</mosaic_0001>

<llo_original>
// kernel: focal_loss.1
$region0: #{focal_loss.1}
  #allocation0 [shape = 'u32[]', space=smem, size = 0x4, offset = 0x4, fixed_abs, tag = 'smem constant byte address 0x4 - core index']
  #allocation1 [shape = 'u32[72,128]{1,0:T(1,128)}', space=vmem, size = 0x9000, scoped, tag = 'internal scratch']
  %s0 = inlined_call_operand.vmem [shape: f32[7,128], index: 0, kind: input, shape index: {}]
  %s1 = inlined_call_operand.vmem [shape: s32[1,128], index: 1, kind: input, shape index: {}]
  %s2 = inlined_call_operand.vmem [shape: f32[7,1], index: 2, kind: input, shape index: {}]
  %s3 = inlined_call_operand.vmem [shape: f32[1,128], index: 3, kind: output, shape index: {0}]
  %s4 = inlined_call_operand.vmem [shape: f32[1,128], index: 4, kind: output, shape index: {1}]
  %5 = xla_tuple %s3, %s4
  %s6 = sld [smem:[#allocation0]]
  $region30: #{focal_loss.1} parent=0
    _
  %s8 = ssub.s32 1, %s6
  %s9 = scalar_select 0, %s8, %s6
  // Predicated region
  $region2: #{focal_loss.1} parent=0 // pred_check
    _
  $region3: #{focal_loss.1} parent=0 // pred_check_branch
    %11 = sbr.rel (0) target = $region5
  $region4: #{focal_loss.1} parent=0 // pred_region
    _
  $region5: #{focal_loss.1} parent=0 // pred_fallthru
    _
  // Predicated region
  $region6: #{focal_loss.1} parent=0 // pred_check
    _
  $region7: #{focal_loss.1} parent=0 // pred_check_branch
    %13 = sbr.rel (0) target = $region9
  $region8: #{focal_loss.1} parent=0 // pred_region
    _
  $region9: #{focal_loss.1} parent=0 // pred_fallthru
    _
  // Predicated region
  $region10: #{focal_loss.1} parent=0 // pred_check
    _
  $region11: #{focal_loss.1} parent=0 // pred_check_branch
    %15 = sbr.rel (0) target = $region13
  $region12: #{focal_loss.1} parent=0 // pred_region
    _
  $region13: #{focal_loss.1} parent=0 // pred_fallthru
    _
  %v16 = vld [vmem:[%s0] sm:$0x7f]
  %v17 = vld [vmem:[%s1] sm:$0x1]
  %v18 = vld [vmem:[%s2] sm:$0x7f]
  %v19 = vlaneseq
  %v20 = vshrl.u32 %v19, 7
  %v21 = vperm.slane %v17, 0
  %vm22 = vcmp.eq.s32.totalorder %v20, %v21
  %vm23 = vcmask 1046528
  %v24 = vsel %vm23, %v16, -inf
  %v25 = vrot.slane %v24, 4
  %v26 = vmax.f32 %v24, %v25
  %v27 = vrot.slane %v26, 2
  %v28 = vmax.f32 %v26, %v27
  %v29 = vrot.slane %v28, 1
  %v30 = vmax.f32 %v28, %v29
  %v31 = vsub.f32 %v16, %v30
  %v32 = vmul.f32 %v31, 1.442695
  %v33 = vpow.pop %v32
  %v34 = vsel %vm23, %v33, 0.0
  %v35 = vrot.slane %v34, 4
  %v36 = vadd.f32 %v34, %v35
  %v37 = vrot.slane %v36, 2
  %v38 = vadd.f32 %v36, %v37
  %v39 = vrot.slane %v38, 1
  %v40 = vadd.f32 %v38, %v39
  %v41 = vsel %vm22, %v16, 0.0
  %v42 = vsel %vm23, %v41, 0.0
  %v43 = vrot.slane %v42, 4
  %v44 = vadd.f32 %v42, %v43
  %v45 = vrot.slane %v44, 2
  %v46 = vadd.f32 %v44, %v45
  %v47 = vrot.slane %v46, 1
  %v48 = vadd.f32 %v46, %v47
  %v49 = vsel %vm22, %v33, 0.0
  %v50 = vsel %vm23, %v49, 0.0
  %v51 = vrot.slane %v50, 4
  %v52 = vadd.f32 %v50, %v51
  %v53 = vrot.slane %v52, 2
  %v54 = vadd.f32 %v52, %v53
  %v55 = vrot.slane %v54, 1
  %v56 = vadd.f32 %v54, %v55
  %58 = vset.pattern.permute.xlu0 0
  %59 = vperm.xlu0 %58, %v18
  %v60 = vpop.permute.xlu0 %59
  %v62 = vsel %vm22, %v60, 0.0
  %v63 = vsel %vm23, %v62, 0.0
  %v64 = vrot.slane %v63, 4
  %v65 = vadd.f32 %v63, %v64
  %v66 = vrot.slane %v65, 2
  %v67 = vadd.f32 %v65, %v66
  %v68 = vrot.slane %v67, 1
  %v69 = vadd.f32 %v67, %v68
  %v70 = vlog2.pop %v40
  %v71 = vmul.f32 %v70, 0.6931472
  %v72 = vadd.f32 %v71, %v30
  %v73 = vsub.f32 %v72, %v48
  %v74 = vrcp.pop %v40
  %v75 = vmul.f32 %v40, %v74
  %v76 = vsub.f32 1.0, %v75
  %v77 = vmul.f32 %v74, %v76
  %v78 = vadd.f32 %v74, %v77
  %vm79 = vweird.f32 %v40
  %vm80 = vweird.f32 %v74
  %vm81 = vmor %vm79, %vm80
  %v82 = vsel %vm81, %v74, %v78
  %v83 = vand.u32 2147483647, %v40
  %vm84 = vcmp.eq.f32.partialorder %v83, 8.507059e+37
  %v85 = vand.u32 %v40, 2147483648
  %v86 = vor.u32 1.1754944e-38, %v85
  %v87 = vsel %vm84, %v86, %v82
  %v88 = vmul.f32 %v56, %v87
  %v89 = vsub.f32 1.0, %v88
  %v90 = vmax.f32 %v89, 0.0
  %v91 = vmul.f32 %v90, %v90
  %v92 = vmul.f32 %v69, %v91
  %v93 = vmul.f32 %v92, %v73
  %94 = vst [vmem:[%s3] sm:$0x1] %v73
  %v95 = vlaneseq
  %v96 = vand.u32 %v95, 127
  %s97 = smul.u32 0, 128
  %v98 = vstv %s97
  %v99 = vadd.s32 %v96, %v98
  %vm100 = vcmp.lt.s32.totalorder %v99, 8
  %v101 = vsel %vm100, %v93, 0.0
  %vm102 = vcmask 1040384
  %v103 = vsel %vm102, %v101, 0.0
  %104 = vadd.xlane.f32.xlu0 %v103
  %v105 = vpop.xlane.xlu0 %104
  %v106 = vrot.slane %v105, 4
  %v107 = vadd.f32 %v105, %v106
  %v108 = vrot.slane %v107, 2
  %v109 = vadd.f32 %v107, %v108
  %v110 = vrot.slane %v109, 1
  %v111 = vadd.f32 %v109, %v110
  %s112 = vtos %v111
  %vm113 = vcmp.eq.s32.totalorder %v96, 0
  %v114 = vstv %s112
  %v115 = vsel %vm113, %v114, 0.0
  %116 = vst [vmem:[%s4] sm:$0x1] %v115
  // Predicated region
  $region14: #{focal_loss.1} parent=0 // pred_check
    _
  $region15: #{focal_loss.1} parent=0 // pred_check_branch
    %118 = sbr.rel (0) target = $region17
  $region16: #{focal_loss.1} parent=0 // pred_region
    _
  $region17: #{focal_loss.1} parent=0 // pred_fallthru
    _
  // Predicated region
  $region18: #{focal_loss.1} parent=0 // pred_check
    _
  $region19: #{focal_loss.1} parent=0 // pred_check_branch
    %120 = sbr.rel (0) target = $region21
  $region20: #{focal_loss.1} parent=0 // pred_region
    _
  $region21: #{focal_loss.1} parent=0 // pred_fallthru
    _
  // Predicated region
  $region22: #{focal_loss.1} parent=0 // pred_check
    _
  $region23: #{focal_loss.1} parent=0 // pred_check_branch
    %122 = sbr.rel (0) target = $region25
  $region24: #{focal_loss.1} parent=0 // pred_region
    _
  $region25: #{focal_loss.1} parent=0 // pred_fallthru
    _
  // Predicated region
  $region26: #{focal_loss.1} parent=0 // pred_check
    _
  $region27: #{focal_loss.1} parent=0 // pred_check_branch
    %124 = sbr.rel (0) target = $region29
  $region28: #{focal_loss.1} parent=0 // pred_region
    _
  $region29: #{focal_loss.1} parent=0 // pred_fallthru
    _

</llo_original>
